<compile_context>
chip_gen: v7x
topology: tpu7x:2x2x1
jax: 0.10.0
libtpu: 0.0.40
codegen_flags: <defaults>
</compile_context>

<pallas_src>
import jax
import jax.numpy as jnp
from jax.experimental import pallas as pl
from jax.experimental.pallas import tpu as pltpu


def mlp_kernel(x_ref, w1_ref, b1_ref, w2_ref, b2_ref, w3_ref, b3_ref, o_ref):
    # Layer 1: Linear + ReLU (MXU matmul, f32 accumulation; bias/ReLU on VPU)
    h1 = jnp.dot(x_ref[...], w1_ref[...], preferred_element_type=jnp.float32)
    h1 = jnp.maximum(h1 + b1_ref[...], 0.0)

    # Layer 2: Linear + ReLU
    h2 = jnp.dot(h1, w2_ref[...], preferred_element_type=jnp.float32)
    h2 = jnp.maximum(h2 + b2_ref[...], 0.0)

    # Layer 3: Linear (no activation) -> direct (tb, n_actions) store (masked
    # lane store; output bytes are kept minimal).
    out = jnp.dot(h2, w3_ref[...], preferred_element_type=jnp.float32)
    o_ref[...] = (out + b3_ref[...]).astype(o_ref.dtype)


def _num_tensorcores():
    """Best-effort detection of TensorCores per chip (v7x has 2)."""
    try:
        kind = jax.devices()[0].device_kind.lower()
        if "v7" in kind or kind.startswith("tpu7"):
            return 2
    except Exception:
        pass
    return 1


def dqn_net_forward(x, params, *, tile_batch=2048):
    """Fused 3-layer MLP forward on TPU via a single batch-tiled Pallas kernel."""
    w1, b1, w2, b2, w3, b3 = params
    batch, n_states = x.shape
    n_hidden = w1.shape[1]
    n_actions = w3.shape[1]

    # --- Lane-dense hidden dim (weights/biases only; VMEM-resident) ---------
    if n_hidden < 128:
        dh = 128 - n_hidden
        w1 = jnp.pad(w1, ((0, 0), (0, dh)))
        b1 = jnp.pad(b1, ((0, 0), (0, dh)))
        w2 = jnp.pad(w2, ((0, dh), (0, dh)))
        b2 = jnp.pad(b2, ((0, 0), (0, dh)))
        w3 = jnp.pad(w3, ((0, dh), (0, 0)))

    # --- Batch tile: no wrapper-side pad/slice of x or out ------------------
    # Pallas clips the partial last block: out-of-bounds rows are never
    # written back, and the row-wise math makes garbage input rows harmless.
    tb_cap = int(tile_batch)
    n_tc = _num_tensorcores()
    if n_tc >= 2 and batch > 8:
        # Ensure >= n_tc grid steps so the "parallel" batch axis shards across
        # both TensorCores on v7x.  (1-TC chips skip this; no extra step.)
        tb_cap = min(tb_cap, 8 * pl.cdiv(pl.cdiv(batch, n_tc), 8))
    if tb_cap >= batch:
        tb = batch                       # single step; block dim == full batch
    else:
        tb = max(8, 8 * (tb_cap // 8))   # must be a multiple of 8 when tiling
    grid_b = pl.cdiv(batch, tb)

    # Weights / biases: full-array blocks with constant index maps -> DMA'd
    # once and VMEM-resident across all grid steps.
    def resident(a):
        nd = a.ndim
        return pl.BlockSpec(a.shape, lambda i, _nd=nd: (0,) * _nd)

    # Future-proofing: if the resident weights grow (larger n_hidden), raise
    # the scoped VMEM limit (v7x has only 64 MiB physical / 32 MiB default).
    resident_bytes = sum(int(a.size) * a.dtype.itemsize
                         for a in (w1, b1, w2, b2, w3, b3))
    io_bytes = tb * (n_states + n_actions) * x.dtype.itemsize
    vmem_est = 2 * (resident_bytes + io_bytes) + (1 << 20)  # double-buffer + slack
    vmem_limit = int(vmem_est) if vmem_est > (16 << 20) else None

    out = pl.pallas_call(
        mlp_kernel,
        out_shape=jax.ShapeDtypeStruct((batch, n_actions), x.dtype),
        grid=(grid_b,),
        in_specs=[
            pl.BlockSpec((tb, n_states), lambda i: (i, 0)),  # x: tiled over batch
            resident(w1), resident(b1),
            resident(w2), resident(b2),
            resident(w3), resident(b3),
        ],
        out_specs=pl.BlockSpec((tb, n_actions), lambda i: (i, 0)),
        compiler_params=pltpu.CompilerParams(
            dimension_semantics=("parallel",),   # shards across TCs on v7x
            vmem_limit_bytes=vmem_limit),
    )(x, w1, b1, w2, b2, w3, b3)
    return out


def init_params(key, n_states, n_hidden, n_actions):
    """Deterministic init mimicking PyTorch nn.Linear default
    (uniform in +/- 1/sqrt(fan_in)). Weights stored as (in, out)."""
    def linear(k, fan_in, fan_out):
        kw, kb = jax.random.split(k)
        bound = 1.0 / jnp.sqrt(fan_in)
        w = jax.random.uniform(kw, (fan_in, fan_out), jnp.float32, -bound, bound)
        b = jax.random.uniform(kb, (1, fan_out), jnp.float32, -bound, bound)
        return w, b

    k1, k2, k3 = jax.random.split(key, 3)
    w1, b1 = linear(k1, n_states, n_hidden)
    w2, b2 = linear(k2, n_hidden, n_hidden)
    w3, b3 = linear(k3, n_hidden, n_actions)
    return (w1, b1, w2, b2, w3, b3)


def reference_forward(x, params):
    """Pure-JAX reference for correctness check."""
    w1, b1, w2, b2, w3, b3 = params
    h = jnp.maximum(x @ w1 + b1, 0.0)
    h = jnp.maximum(h @ w2 + b2, 0.0)
    return h @ w3 + b3


if __name__ == "__main__":
    # Small shapes consistent with a DQN MLP (CartPole-ish sizes).
    batch, n_states, n_hidden, n_actions = 8, 16, 32, 4

    key = jax.random.PRNGKey(0)
    kx, kp, kx2 = jax.random.split(key, 3)
    params = init_params(kp, n_states, n_hidden, n_actions)

    # Case 1: tiny batch (single grid step, block == full batch dim).
    x = jax.random.normal(kx, (batch, n_states), jnp.float32)
    out = dqn_net_forward(x, params)
    jax.block_until_ready(out)
    ref = reference_forward(x, params)
    assert out.shape == (batch, n_actions)
    assert jnp.allclose(out, ref, atol=1e-5, rtol=1e-5)

    # Case 2: larger, non-multiple batch exercising the tiled grid with a
    # partial (clipped) last block -- verifies OOB rows are masked on store.
    big_batch = 300
    x2 = jax.random.normal(kx2, (big_batch, n_states), jnp.float32)
    out2 = dqn_net_forward(x2, params, tile_batch=128)
    jax.block_until_ready(out2)
    ref2 = reference_forward(x2, params)
    assert out2.shape == (big_batch, n_actions)
    assert jnp.allclose(out2, ref2, atol=1e-5, rtol=1e-5)

    # Case 3: same batch with the default (large) tile -- on 1-TC chips the
    # whole batch is one block (block dim == full, non-multiple-of-8 batch);
    # on v7x the tile is auto-capped so both TensorCores get a step.
    out3 = dqn_net_forward(x2, params)
    jax.block_until_ready(out3)
    assert out3.shape == (big_batch, n_actions)
    assert jnp.allclose(out3, ref2, atol=1e-5, rtol=1e-5)

    print("KERNEL_OK")
</pallas_src>

<mosaic_0001>
module attributes {stable_mosaic.version = 11 : i64} {
  func.func @mlp_kernel(%arg0: i32, %arg1: memref<8x16xf32, #tpu.memory_space<vmem>>, %arg2: memref<16x128xf32, #tpu.memory_space<vmem>>, %arg3: memref<1x128xf32, #tpu.memory_space<vmem>>, %arg4: memref<128x128xf32, #tpu.memory_space<vmem>>, %arg5: memref<1x128xf32, #tpu.memory_space<vmem>>, %arg6: memref<128x4xf32, #tpu.memory_space<vmem>>, %arg7: memref<1x4xf32, #tpu.memory_space<vmem>>, %arg8: memref<8x4xf32, #tpu.memory_space<vmem>>) attributes {dimension_semantics = [#tpu.dimension_semantics<parallel>], iteration_bounds = array<i64: 1>, scalar_prefetch = 0 : i64, scratch_operands = 0 : i64, tpu.core_type = #tpu.core_type<tc>, window_params = [{transform_indices = @transform_0, window_bounds = array<i64: 8, 16>}, {pipeline_mode = #tpu.pipeline_mode<synchronous>, transform_indices = @transform_1, window_bounds = array<i64: 16, 128>}, {pipeline_mode = #tpu.pipeline_mode<synchronous>, transform_indices = @transform_2, window_bounds = array<i64: 1, 128>}, {pipeline_mode = #tpu.pipeline_mode<synchronous>, transform_indices = @transform_3, window_bounds = array<i64: 128, 128>}, {pipeline_mode = #tpu.pipeline_mode<synchronous>, transform_indices = @transform_4, window_bounds = array<i64: 1, 128>}, {pipeline_mode = #tpu.pipeline_mode<synchronous>, transform_indices = @transform_5, window_bounds = array<i64: 128, 4>}, {pipeline_mode = #tpu.pipeline_mode<synchronous>, transform_indices = @transform_6, window_bounds = array<i64: 1, 4>}, {transform_indices = @transform_7, window_bounds = array<i64: 8, 4>}]} {
    %c0 = arith.constant 0 : index
    %c0_0 = arith.constant 0 : index
    %0 = vector.load %arg1[%c0, %c0_0] : memref<8x16xf32, #tpu.memory_space<vmem>>, vector<8x16xf32>
    %c0_1 = arith.constant 0 : index
    %c0_2 = arith.constant 0 : index
    %1 = vector.load %arg2[%c0_1, %c0_2] : memref<16x128xf32, #tpu.memory_space<vmem>>, vector<16x128xf32>
    %cst = arith.constant dense<0.000000e+00> : vector<8x128xf32>
    %2 = tpu.matmul %0, %1, %cst {dimension_numbers = #tpu.dot_dimension_numbers<[1], [0], [0], [1], [0, 0, 1, 1], [], []>} : vector<8x16xf32>, vector<16x128xf32>, vector<8x128xf32> -> vector<8x128xf32>
    %c0_3 = arith.constant 0 : index
    %c0_4 = arith.constant 0 : index
    %3 = vector.load %arg3[%c0_3, %c0_4] : memref<1x128xf32, #tpu.memory_space<vmem>>, vector<1x128xf32>
    %4 = vector.broadcast %3 : vector<1x128xf32> to vector<8x128xf32>
    %5 = arith.addf %2, %4 : vector<8x128xf32>
    %cst_5 = arith.constant 0.000000e+00 : f32
    %6 = vector.broadcast %cst_5 : f32 to vector<8x128xf32>
    %7 = arith.maximumf %5, %6 : vector<8x128xf32>
    %c0_6 = arith.constant 0 : index
    %c0_7 = arith.constant 0 : index
    %8 = vector.load %arg4[%c0_6, %c0_7] : memref<128x128xf32, #tpu.memory_space<vmem>>, vector<128x128xf32>
    %cst_8 = arith.constant dense<0.000000e+00> : vector<8x128xf32>
    %9 = tpu.matmul %7, %8, %cst_8 {dimension_numbers = #tpu.dot_dimension_numbers<[1], [0], [0], [1], [0, 0, 1, 1], [], []>} : vector<8x128xf32>, vector<128x128xf32>, vector<8x128xf32> -> vector<8x128xf32>
    %c0_9 = arith.constant 0 : index
    %c0_10 = arith.constant 0 : index
    %10 = vector.load %arg5[%c0_9, %c0_10] : memref<1x128xf32, #tpu.memory_space<vmem>>, vector<1x128xf32>
    %11 = vector.broadcast %10 : vector<1x128xf32> to vector<8x128xf32>
    %12 = arith.addf %9, %11 : vector<8x128xf32>
    %cst_11 = arith.constant 0.000000e+00 : f32
    %13 = vector.broadcast %cst_11 : f32 to vector<8x128xf32>
    %14 = arith.maximumf %12, %13 : vector<8x128xf32>
    %c0_12 = arith.constant 0 : index
    %c0_13 = arith.constant 0 : index
    %15 = vector.load %arg6[%c0_12, %c0_13] : memref<128x4xf32, #tpu.memory_space<vmem>>, vector<128x4xf32>
    %cst_14 = arith.constant dense<0.000000e+00> : vector<8x4xf32>
    %16 = tpu.matmul %14, %15, %cst_14 {dimension_numbers = #tpu.dot_dimension_numbers<[1], [0], [0], [1], [0, 0, 1, 1], [], []>} : vector<8x128xf32>, vector<128x4xf32>, vector<8x4xf32> -> vector<8x4xf32>
    %c0_15 = arith.constant 0 : index
    %c0_16 = arith.constant 0 : index
    %17 = vector.load %arg7[%c0_15, %c0_16] : memref<1x4xf32, #tpu.memory_space<vmem>>, vector<1x4xf32>
    %18 = vector.broadcast %17 : vector<1x4xf32> to vector<8x4xf32>
    %19 = arith.addf %16, %18 : vector<8x4xf32>
    %c0_17 = arith.constant 0 : index
    %c0_18 = arith.constant 0 : index
    %20 = vector.load %arg8[%c0_17, %c0_18] : memref<8x4xf32, #tpu.memory_space<vmem>>, vector<8x4xf32>
    tpu.vector_store %arg8[%c0_17, %c0_18], %19 {strides = array<i32>} : memref<8x4xf32, #tpu.memory_space<vmem>>, vector<8x4xf32>,
    return
  }
  func.func @transform_0(%arg0: i32) -> (i32, i32) {
    %c0_i32 = arith.constant 0 : i32
    %c0_i32_0 = arith.constant 0 : i32
    return %arg0, %c0_i32 : i32, i32
  }
  func.func @transform_1(%arg0: i32) -> (i32, i32) {
    %c0_i32 = arith.constant 0 : i32
    %c0_i32_0 = arith.constant 0 : i32
    %c0_i32_1 = arith.constant 0 : i32
    return %c0_i32, %c0_i32_0 : i32, i32
  }
  func.func @transform_2(%arg0: i32) -> (i32, i32) {
    %c0_i32 = arith.constant 0 : i32
    %c0_i32_0 = arith.constant 0 : i32
    %c0_i32_1 = arith.constant 0 : i32
    return %c0_i32, %c0_i32_0 : i32, i32
  }
  func.func @transform_3(%arg0: i32) -> (i32, i32) {
    %c0_i32 = arith.constant 0 : i32
    %c0_i32_0 = arith.constant 0 : i32
    %c0_i32_1 = arith.constant 0 : i32
    return %c0_i32, %c0_i32_0 : i32, i32
  }
  func.func @transform_4(%arg0: i32) -> (i32, i32) {
    %c0_i32 = arith.constant 0 : i32
    %c0_i32_0 = arith.constant 0 : i32
    %c0_i32_1 = arith.constant 0 : i32
    return %c0_i32, %c0_i32_0 : i32, i32
  }
  func.func @transform_5(%arg0: i32) -> (i32, i32) {
    %c0_i32 = arith.constant 0 : i32
    %c0_i32_0 = arith.constant 0 : i32
    %c0_i32_1 = arith.constant 0 : i32
    return %c0_i32, %c0_i32_0 : i32, i32
  }
  func.func @transform_6(%arg0: i32) -> (i32, i32) {
    %c0_i32 = arith.constant 0 : i32
    %c0_i32_0 = arith.constant 0 : i32
    %c0_i32_1 = arith.constant 0 : i32
    return %c0_i32, %c0_i32_0 : i32, i32
  }
  func.func @transform_7(%arg0: i32) -> (i32, i32) {
    %c0_i32 = arith.constant 0 : i32
    %c0_i32_0 = arith.constant 0 : i32
    return %arg0, %c0_i32 : i32, i32
  }
}

</mosaic_0001>

<llo_original>
// kernel: tpu_custom_call.1
$region0: #{tpu_custom_call.1}
  #allocation0 [shape = 'u32[]', space=smem, size = 0x4, offset = 0x4, fixed_abs, tag = 'smem constant byte address 0x4 - core index']
  #allocation1 [shape = 'u32[144,128]{1,0:T(1,128)}', space=vmem, size = 0x12000, scoped, tag = 'internal scratch']
  %s0 = inlined_call_operand.vmem [shape: f32[8,16], index: 0, kind: input, shape index: {}]
  %s1 = inlined_call_operand.hbm [shape: f32[16,128], index: 1, kind: input, shape index: {}]
  %s2 = inlined_call_operand.vmem [shape: f32[1,128], index: 2, kind: input, shape index: {}]
  %s3 = inlined_call_operand.vmem [shape: f32[128,128], index: 3, kind: input, shape index: {}]
  %s4 = inlined_call_operand.vmem [shape: f32[1,128], index: 4, kind: input, shape index: {}]
  %s5 = inlined_call_operand.vmem [shape: f32[128,4], index: 5, kind: input, shape index: {}]
  %s6 = inlined_call_operand.vmem [shape: f32[1,4], index: 6, kind: input, shape index: {}]
  %s7 = inlined_call_operand.vmem [shape: f32[8,4], index: 7, kind: output, shape index: {}]
  %s8 = sld [smem:[#allocation0]]
  $region42: #{tpu_custom_call.1} parent=0
    _
  %s10 = ssub.s32 1, %s8
  %s11 = scalar_select 0, %s10, %s8
  $region1: #{tpu_custom_call.1} parent=0
    #allocation2 [shape = 'u8[8192]{0}', space=vmem, size = 0x2000, scoped, tag = 'input window, operand 1, single buffered']
    #allocation3 [shape = 's32[1]{0}', space=sflag, size = 0x4, scoped, tag = 'scoped memory for tpu_custom_call.1']
    %12 = vsyncpa [#allocation3], 0
    // Predicated region
    $region2: #{tpu_custom_call.1} parent=1 // pred_check
      _
    $region3: #{tpu_custom_call.1} parent=1 // pred_check_branch
      %14 = sbr.rel (0) target = $region5
    $region4: #{tpu_custom_call.1} parent=1 // pred_region
      _
    $region5: #{tpu_custom_call.1} parent=1 // pred_fallthru
      _
    // Predicated region
    $region6: #{tpu_custom_call.1} parent=1 // pred_check
      _
    $region7: #{tpu_custom_call.1} parent=1 // pred_check_branch
      %16 = sbr.rel (0) target = $region9
    $region8: #{tpu_custom_call.1} parent=1 // pred_region
      %s18 = ssub.s32 256, 256
      %19 = vsyncadd [#allocation3], %s18
      %s20 = sshll.u32 [#allocation2], 4
      %s21 = int_to_ptr.vmem [resolvable:$true] %s20
      %26 = dma.hbm_to_vmem [thread:$0]  %s1, 256, %s21, [#allocation3], 128, 128, 8
    $region9: #{tpu_custom_call.1} parent=1 // pred_fallthru
      _
    // Predicated region
    $region10: #{tpu_custom_call.1} parent=1 // pred_check
      _
    $region11: #{tpu_custom_call.1} parent=1 // pred_check_branch
      %28 = sbr.rel (0) target = $region13
    $region12: #{tpu_custom_call.1} parent=1 // pred_region
      _
    $region13: #{tpu_custom_call.1} parent=1 // pred_fallthru
      _
    // Predicated region
    $region14: #{tpu_custom_call.1} parent=1 // pred_check
      _
    $region15: #{tpu_custom_call.1} parent=1 // pred_check_branch
      %30 = sbr.rel (0) target = $region17
    $region16: #{tpu_custom_call.1} parent=1 // pred_region
      _
    $region17: #{tpu_custom_call.1} parent=1 // pred_fallthru
      _
    // Predicated region
    $region18: #{tpu_custom_call.1} parent=1 // pred_check
      _
    $region19: #{tpu_custom_call.1} parent=1 // pred_check_branch
      %32 = sbr.rel (0) target = $region21
    $region20: #{tpu_custom_call.1} parent=1 // pred_region
      _
    $region21: #{tpu_custom_call.1} parent=1 // pred_fallthru
      _
    // Predicated region
    $region22: #{tpu_custom_call.1} parent=1 // pred_check
      _
    $region23: #{tpu_custom_call.1} parent=1 // pred_check_branch
      %34 = sbr.rel (0) target = $region25
    $region24: #{tpu_custom_call.1} parent=1 // pred_region
      _
    $region25: #{tpu_custom_call.1} parent=1 // pred_fallthru
      _
    // Predicated region
    $region26: #{tpu_custom_call.1} parent=1 // pred_check
      _
    $region27: #{tpu_custom_call.1} parent=1 // pred_check_branch
      %36 = sbr.rel (0) target = $region29
    $region28: #{tpu_custom_call.1} parent=1 // pred_region
      _
    $region29: #{tpu_custom_call.1} parent=1 // pred_fallthru
      _
    // Predicated region
    $region30: #{tpu_custom_call.1} parent=1 // pred_check
      _
    $region31: #{tpu_custom_call.1} parent=1 // pred_check_branch
      %38 = sbr.rel (0) target = $region33
    $region32: #{tpu_custom_call.1} parent=1 // pred_region
      %39 = dma.done [#allocation3], 256
    $region33: #{tpu_custom_call.1} parent=1 // pred_fallthru
      _
    %v40 = vld [vmem:[%s0] sm:$0xff]
    %v41 = vld [vmem:[#allocation2] sm:$0xff]
    %v42 = vld [vmem:[#allocation2 + $0x8] sm:$0xff]
    %v43 = vld [vmem:[%s2] sm:$0x1]
    %v45 = vlaneseq
    %v46 = vshrl.u32 %v45, 7
    %v47 = vsub.s32 0, %v46
    %v48 = vrot.slane %v43, %v47
    %vm50 = vcmask 130048
    %v52 = vsel %vm50, %v40, 0
    %54 = vmatprep.subr.mxu0 0.0
    %55 = vmatpush1.msra.mxu0 %v41
    %56 = vmatprep.subr.mxu0 0.0
    %57 = vmatpush1.msra.mxu0 %v42
    %58 = vmatprep.subr.mxu0 0.0
    %59 = vmatpush1.msra.mxu0 0.0
    %60 = vmatprep.subr.mxu0 0.0
    %61 = vmatpush1.msra.mxu0 0.0
    %62 = vmatprep.subr.mxu0 0.0
    %63 = vmatpush1.msra.mxu0 0.0
    %64 = vmatprep.subr.mxu0 0.0
    %65 = vmatpush1.msra.mxu0 0.0
    %66 = vmatprep.subr.mxu0 0.0
    %67 = vmatpush1.msra.mxu0 0.0
    %68 = vmatprep.subr.mxu0 0.0
    %69 = vmatpush1.msra.mxu0 0.0
    %70 = vmatprep.subr.mxu0 0.0
    %71 = vmatpush1.msra.mxu0 0.0
    %72 = vmatprep.subr.mxu0 0.0
    %73 = vmatpush1.msra.mxu0 0.0
    %74 = vmatprep.subr.mxu0 0.0
    %75 = vmatpush1.msra.mxu0 0.0
    %76 = vmatprep.subr.mxu0 0.0
    %77 = vmatpush1.msra.mxu0 0.0
    %78 = vmatprep.subr.mxu0 0.0
    %79 = vmatpush1.msra.mxu0 0.0
    %80 = vmatprep.subr.mxu0 0.0
    %81 = vmatpush1.msra.mxu0 0.0
    %82 = vmatprep.subr.mxu0 0.0
    %83 = vmatpush1.msra.mxu0 0.0
    %84 = vmatprep.subr.mxu0 0.0
    %85 = vmatpush1.msra.mxu0 0.0
    %86 = vmatprep.subr.mxu0 0.0
    %87 = vmatpush1.msra.mxu0 0.0
    %88 = vmatprep.subr.mxu0 0.0
    %89 = vmatpush1.msra.mxu0 0.0
    %90 = vmatprep.subr.mxu0 0.0
    %91 = vmatpush1.msra.mxu0 0.0
    %92 = vmatprep.subr.mxu0 0.0
    %93 = vmatpush1.msra.mxu0 0.0
    %94 = vmatprep.subr.mxu0 0.0
    %95 = vmatpush1.msra.mxu0 0.0
    %96 = vmatprep.subr.mxu0 0.0
    %97 = vmatpush1.msra.mxu0 0.0
    %98 = vmatprep.subr.mxu0 0.0
    %99 = vmatpush1.msra.mxu0 0.0
    %100 = vmatprep.subr.mxu0 0.0
    %101 = vmatpush1.msra.mxu0 0.0
    %102 = vmatprep.subr.mxu0 0.0
    %103 = vmatpush1.msra.mxu0 0.0
    %104 = vmatprep.subr.mxu0 0.0
    %105 = vmatpush1.msra.mxu0 0.0
    %106 = vmatprep.subr.mxu0 0.0
    %107 = vmatpush1.msra.mxu0 0.0
    %108 = vmatprep.subr.mxu0 0.0
    %109 = vmatpush1.msra.mxu0 0.0
    %110 = vmatprep.subr.mxu0 0.0
    %111 = vmatpush1.msra.mxu0 0.0
    %112 = vmatprep.subr.mxu0 0.0
    %113 = vmatpush1.msra.mxu0 0.0
    %114 = vmatprep.subr.mxu0 0.0
    %115 = vmatpush1.msra.mxu0 0.0
    %116 = vmatprep.subr.mxu0 0.0
    %117 = vmatpush1.msra.mxu0 0.0
    %118 = vmatprep.mubr.f32.mxu0 0.0
    %119 = vmatmul.mubr.f32.gmra.mrb[0].mxu0 %v52
    %v120 = vpop.f32.mrb[0].mxu0
    %v121 = vadd.f32 %v48, %v120
    %v122 = vpop.f32.mrb[0].mxu0
    %123 = vdwg.mxu0
    %v124 = vmax.f32 %v121, 0.0
    %v125 = vld [vmem:[%s3] sm:$0xff]
    %v126 = vld [vmem:[%s3 + $0x8] sm:$0xff]
    %v127 = vld [vmem:[%s3 + $0x10] sm:$0xff]
    %v128 = vld [vmem:[%s3 + $0x18] sm:$0xff]
    %v129 = vld [vmem:[%s3 + $0x20] sm:$0xff]
    %v130 = vld [vmem:[%s3 + $0x28] sm:$0xff]
    %v131 = vld [vmem:[%s3 + $0x30] sm:$0xff]
    %v132 = vld [vmem:[%s3 + $0x38] sm:$0xff]
    %v133 = vld [vmem:[%s3 + $0x40] sm:$0xff]
    %v134 = vld [vmem:[%s3 + $0x48] sm:$0xff]
    %v135 = vld [vmem:[%s3 + $0x50] sm:$0xff]
    %v136 = vld [vmem:[%s3 + $0x58] sm:$0xff]
    %v137 = vld [vmem:[%s3 + $0x60] sm:$0xff]
    %v138 = vld [vmem:[%s3 + $0x68] sm:$0xff]
    %v139 = vld [vmem:[%s3 + $0x70] sm:$0xff]
    %v140 = vld [vmem:[%s3 + $0x78] sm:$0xff]
    %v141 = vld [vmem:[%s4] sm:$0x1]
    %v143 = vlaneseq
    %v144 = vshrl.u32 %v143, 7
    %v145 = vsub.s32 0, %v144
    %v146 = vrot.slane %v141, %v145
    %148 = vmatprep.subr.mxu0 0.0
    %149 = vmatpush1.msra.mxu0 %v125
    %150 = vmatprep.subr.mxu0 0.0
    %151 = vmatpush1.msra.mxu0 %v126
    %152 = vmatprep.subr.mxu0 0.0
    %153 = vmatpush1.msra.mxu0 %v127
    %154 = vmatprep.subr.mxu0 0.0
    %155 = vmatpush1.msra.mxu0 %v128
    %156 = vmatprep.subr.mxu0 0.0
    %157 = vmatpush1.msra.mxu0 %v129
    %158 = vmatprep.subr.mxu0 0.0
    %159 = vmatpush1.msra.mxu0 %v130
    %160 = vmatprep.subr.mxu0 0.0
    %161 = vmatpush1.msra.mxu0 %v131
    %162 = vmatprep.subr.mxu0 0.0
    %163 = vmatpush1.msra.mxu0 %v132
    %164 = vmatprep.subr.mxu0 0.0
    %165 = vmatpush1.msra.mxu0 %v133
    %166 = vmatprep.subr.mxu0 0.0
    %167 = vmatpush1.msra.mxu0 %v134
    %168 = vmatprep.subr.mxu0 0.0
    %169 = vmatpush1.msra.mxu0 %v135
    %170 = vmatprep.subr.mxu0 0.0
    %171 = vmatpush1.msra.mxu0 %v136
    %172 = vmatprep.subr.mxu0 0.0
    %173 = vmatpush1.msra.mxu0 %v137
    %174 = vmatprep.subr.mxu0 0.0
    %175 = vmatpush1.msra.mxu0 %v138
    %176 = vmatprep.subr.mxu0 0.0
    %177 = vmatpush1.msra.mxu0 %v139
    %178 = vmatprep.subr.mxu0 0.0
    %179 = vmatpush1.msra.mxu0 %v140
    %180 = vmatprep.subr.mxu0 0.0
    %181 = vmatpush1.msra.mxu0 0.0
    %182 = vmatprep.subr.mxu0 0.0
    %183 = vmatpush1.msra.mxu0 0.0
    %184 = vmatprep.subr.mxu0 0.0
    %185 = vmatpush1.msra.mxu0 0.0
    %186 = vmatprep.subr.mxu0 0.0
    %187 = vmatpush1.msra.mxu0 0.0
    %188 = vmatprep.subr.mxu0 0.0
    %189 = vmatpush1.msra.mxu0 0.0
    %190 = vmatprep.subr.mxu0 0.0
    %191 = vmatpush1.msra.mxu0 0.0
    %192 = vmatprep.subr.mxu0 0.0
    %193 = vmatpush1.msra.mxu0 0.0
    %194 = vmatprep.subr.mxu0 0.0
    %195 = vmatpush1.msra.mxu0 0.0
    %196 = vmatprep.subr.mxu0 0.0
    %197 = vmatpush1.msra.mxu0 0.0
    %198 = vmatprep.subr.mxu0 0.0
    %199 = vmatpush1.msra.mxu0 0.0
    %200 = vmatprep.subr.mxu0 0.0
    %201 = vmatpush1.msra.mxu0 0.0
    %202 = vmatprep.subr.mxu0 0.0
    %203 = vmatpush1.msra.mxu0 0.0
    %204 = vmatprep.subr.mxu0 0.0
    %205 = vmatpush1.msra.mxu0 0.0
    %206 = vmatprep.subr.mxu0 0.0
    %207 = vmatpush1.msra.mxu0 0.0
    %208 = vmatprep.subr.mxu0 0.0
    %209 = vmatpush1.msra.mxu0 0.0
    %210 = vmatprep.subr.mxu0 0.0
    %211 = vmatpush1.msra.mxu0 0.0
    %212 = vmatprep.mubr.f32.mxu0 0.0
    %213 = vmatmul.mubr.f32.gmra.mrb[0].mxu0 %v124
    %v214 = vpop.f32.mrb[0].mxu0
    %v215 = vadd.f32 %v146, %v214
    %v216 = vpop.f32.mrb[0].mxu0
    %217 = vdwg.mxu0
    %v218 = vmax.f32 %v215, 0.0
    %v219 = vld [vmem:[%s5] sm:$0xff]
    %v220 = vld [vmem:[%s5 + $0x8] sm:$0xff]
    %v221 = vld [vmem:[%s5 + $0x10] sm:$0xff]
    %v222 = vld [vmem:[%s5 + $0x18] sm:$0xff]
    %v223 = vld [vmem:[%s5 + $0x20] sm:$0xff]
    %v224 = vld [vmem:[%s5 + $0x28] sm:$0xff]
    %v225 = vld [vmem:[%s5 + $0x30] sm:$0xff]
    %v226 = vld [vmem:[%s5 + $0x38] sm:$0xff]
    %v227 = vld [vmem:[%s5 + $0x40] sm:$0xff]
    %v228 = vld [vmem:[%s5 + $0x48] sm:$0xff]
    %v229 = vld [vmem:[%s5 + $0x50] sm:$0xff]
    %v230 = vld [vmem:[%s5 + $0x58] sm:$0xff]
    %v231 = vld [vmem:[%s5 + $0x60] sm:$0xff]
    %v232 = vld [vmem:[%s5 + $0x68] sm:$0xff]
    %v233 = vld [vmem:[%s5 + $0x70] sm:$0xff]
    %v234 = vld [vmem:[%s5 + $0x78] sm:$0xff]
    %v235 = vld [vmem:[%s6] sm:$0x1]
    %v237 = vlaneseq
    %v238 = vshrl.u32 %v237, 7
    %v239 = vsub.s32 0, %v238
    %v240 = vrot.slane %v235, %v239
    %242 = vmatprep.subr.mxu0 0.0
    %243 = vmatpush1.msra.mxu0 %v219
    %244 = vmatprep.subr.mxu0 0.0
    %245 = vmatpush1.msra.mxu0 %v220
    %246 = vmatprep.subr.mxu0 0.0
    %247 = vmatpush1.msra.mxu0 %v221
    %248 = vmatprep.subr.mxu0 0.0
    %249 = vmatpush1.msra.mxu0 %v222
    %250 = vmatprep.subr.mxu0 0.0
    %251 = vmatpush1.msra.mxu0 %v223
    %252 = vmatprep.subr.mxu0 0.0
    %253 = vmatpush1.msra.mxu0 %v224
    %254 = vmatprep.subr.mxu0 0.0
    %255 = vmatpush1.msra.mxu0 %v225
    %256 = vmatprep.subr.mxu0 0.0
    %257 = vmatpush1.msra.mxu0 %v226
    %258 = vmatprep.subr.mxu0 0.0
    %259 = vmatpush1.msra.mxu0 %v227
    %260 = vmatprep.subr.mxu0 0.0
    %261 = vmatpush1.msra.mxu0 %v228
    %262 = vmatprep.subr.mxu0 0.0
    %263 = vmatpush1.msra.mxu0 %v229
    %264 = vmatprep.subr.mxu0 0.0
    %265 = vmatpush1.msra.mxu0 %v230
    %266 = vmatprep.subr.mxu0 0.0
    %267 = vmatpush1.msra.mxu0 %v231
    %268 = vmatprep.subr.mxu0 0.0
    %269 = vmatpush1.msra.mxu0 %v232
    %270 = vmatprep.subr.mxu0 0.0
    %271 = vmatpush1.msra.mxu0 %v233
    %272 = vmatprep.subr.mxu0 0.0
    %273 = vmatpush1.msra.mxu0 %v234
    %274 = vmatprep.subr.mxu0 0.0
    %275 = vmatpush1.msra.mxu0 0.0
    %276 = vmatprep.subr.mxu0 0.0
    %277 = vmatpush1.msra.mxu0 0.0
    %278 = vmatprep.subr.mxu0 0.0
    %279 = vmatpush1.msra.mxu0 0.0
    %280 = vmatprep.subr.mxu0 0.0
    %281 = vmatpush1.msra.mxu0 0.0
    %282 = vmatprep.subr.mxu0 0.0
    %283 = vmatpush1.msra.mxu0 0.0
    %284 = vmatprep.subr.mxu0 0.0
    %285 = vmatpush1.msra.mxu0 0.0
    %286 = vmatprep.subr.mxu0 0.0
    %287 = vmatpush1.msra.mxu0 0.0
    %288 = vmatprep.subr.mxu0 0.0
    %289 = vmatpush1.msra.mxu0 0.0
    %290 = vmatprep.subr.mxu0 0.0
    %291 = vmatpush1.msra.mxu0 0.0
    %292 = vmatprep.subr.mxu0 0.0
    %293 = vmatpush1.msra.mxu0 0.0
    %294 = vmatprep.subr.mxu0 0.0
    %295 = vmatpush1.msra.mxu0 0.0
    %296 = vmatprep.subr.mxu0 0.0
    %297 = vmatpush1.msra.mxu0 0.0
    %298 = vmatprep.subr.mxu0 0.0
    %299 = vmatpush1.msra.mxu0 0.0
    %300 = vmatprep.subr.mxu0 0.0
    %301 = vmatpush1.msra.mxu0 0.0
    %302 = vmatprep.subr.mxu0 0.0
    %303 = vmatpush1.msra.mxu0 0.0
    %304 = vmatprep.subr.mxu0 0.0
    %305 = vmatpush1.msra.mxu0 0.0
    %306 = vmatprep.mubr.f32.mxu0 0.0
    %307 = vmatmul.mubr.f32.gmra.mrb[0].mxu0 %v218
    %v308 = vpop.f32.mrb[0].mxu0
    %v309 = vadd.f32 %v240, %v308
    %v310 = vpop.f32.mrb[0].mxu0
    %311 = vdwg.mxu0
    %vm312 = vcmask 31744
    %313 = vst.msk [vmem:[%s7] sm:$0xff] %vm312, %v309
    // Predicated region
    $region34: #{tpu_custom_call.1} parent=1 // pred_check
      _
    $region35: #{tpu_custom_call.1} parent=1 // pred_check_branch
      %315 = sbr.rel (0) target = $region37
    $region36: #{tpu_custom_call.1} parent=1 // pred_region
      _
    $region37: #{tpu_custom_call.1} parent=1 // pred_fallthru
      _
    // Predicated region
    $region38: #{tpu_custom_call.1} parent=1 // pred_check
      _
    $region39: #{tpu_custom_call.1} parent=1 // pred_check_branch
      %317 = sbr.rel (0) target = $region41
    $region40: #{tpu_custom_call.1} parent=1 // pred_region
      _
    $region41: #{tpu_custom_call.1} parent=1 // pred_fallthru
      _
    %318 = vsyncpa [#allocation3], 1

</llo_original>
